<compile_context>
chip_gen: v6e
topology: v6e:2x2x1
jax: 0.10.0
libtpu: 0.0.40
codegen_flags: <defaults>
</compile_context>

<pallas_src>
import jax
import jax.numpy as jnp
from jax.experimental import pallas as pl
from jax.experimental.pallas import tpu as pltpu


def _round_up(x, m):
    return ((x + m - 1) // m) * m


def _block_bytes(shape, elt=4):
    """Bytes a block really occupies in VMEM after (8, 128) native tiling."""
    s = list(shape)
    if len(s) >= 2:
        s[-1] = _round_up(s[-1], 128)
        s[-2] = _round_up(s[-2], 8)
    else:
        s[-1] = _round_up(s[-1], 128)
    n = 1
    for d in s:
        n *= d
    return n * elt


def _brute_force_divergence_kernel(xT_ref, w1t_ref, beff_ref, w2t_ref, b2_ref,
                                   c_ref, dxsT_ref, negdivT_ref):
    # xT_ref:      [D, TB]  current batch tile (batch on the lane axis)
    # w1t_ref:     [H, D]   resident (= W1^T)
    # beff_ref:    [H, 1]   resident (= (b1 + t*wt)^T, folded in wrapper)
    # w2t_ref:     [D, H]   resident (= W2^T)
    # b2_ref:      [D, 1]   resident (= b2^T)
    # c_ref:       [1, H]   resident (c_k = sum_i W1[i,k] * W2[k,i])
    # dxsT_ref:    [D, TB]  output (dxs^T)       -- full-lane unmasked stores
    # negdivT_ref: [1, TB]  output (-div)^T      -- lane-dense store
    x = xT_ref[...]

    # dynamics forward: h = tanh(W1^T x + b_eff)            -> [H, TB]
    a = jnp.dot(w1t_ref[...], x, preferred_element_type=jnp.float32) + beff_ref[...]
    h = jnp.tanh(a)

    # dxs^T = W2^T h + b2^T                                  -> [D, TB]
    dxs = jnp.dot(w2t_ref[...], h, preferred_element_type=jnp.float32) + b2_ref[...]
    dxsT_ref[...] = dxs.astype(dxsT_ref.dtype)

    # exact divergence (trace of Jacobian) as a tiny MXU matmul:
    #   trace^T = c @ (1 - h*h)                              -> [1, TB]
    s = 1.0 - h * h
    div = jnp.dot(c_ref[...], s, preferred_element_type=jnp.float32)
    negdivT_ref[...] = (-div).astype(negdivT_ref.dtype)


def brute_force_estimator_fast(params, t, xs, *, block_b=2048):
    """Pallas equivalent of BruteForceEstimatorFast.forward with the built-in
    tanh-MLP dynamics.  Returns (dxs [B, D], -divergence [B, 1]) in float32."""
    w1 = params["w1"].astype(jnp.float32)   # [D, H]
    b1 = params["b1"].astype(jnp.float32)   # [1, H]
    wt = params["wt"].astype(jnp.float32)   # [1, H]
    w2 = params["w2"].astype(jnp.float32)   # [H, D]
    b2 = params["b2"].astype(jnp.float32)   # [1, D]

    B, D = xs.shape
    H = w1.shape[1]

    # Batch-independent constants hoisted out of the kernel (transposed layout).
    t_f = jnp.asarray(t, dtype=jnp.float32)
    w1t = jnp.transpose(w1)                                      # [H, D]
    w2t = jnp.transpose(w2)                                      # [D, H]
    bias_eff = jnp.transpose(b1 + t_f * wt)                      # [H, 1]
    b2t = jnp.transpose(b2)                                      # [D, 1]
    c = jnp.sum(w1 * jnp.transpose(w2), axis=0, keepdims=True)   # [1, H]

    # Chip-aware VMEM cap: half of physical VMEM (~64 MiB on 128-MiB v5e/v6e,
    # 32 MiB on v7x), with a conservative fallback if the query is unavailable.
    phys_vmem = 64 * 1024 * 1024
    if hasattr(pltpu, "get_tpu_info"):
        try:
            cap_attr = getattr(pltpu.get_tpu_info(), "vmem_capacity_bytes", None)
            if cap_attr:
                phys_vmem = int(cap_attr)
        except Exception:
            pass
    vmem_cap = max(16 * 1024 * 1024, min(phys_vmem // 2, 96 * 1024 * 1024))

    def vmem_estimate(tb):
        # Streaming tiles (x^T in, dxs^T / -div^T out) are double-buffered by
        # Pallas; resident params are double-buffered too (default); a/h/s
        # temporaries live in f32.  All sizes are (8,128)-padding aware.
        stream = 2 * (2 * _block_bytes((D, tb)) + _block_bytes((1, tb)))
        resident = 2 * (_block_bytes((H, D)) + _block_bytes((H, 1)) +
                        _block_bytes((D, H)) + _block_bytes((D, 1)) +
                        _block_bytes((1, H)))
        temps = 4 * _block_bytes((H, tb))
        return stream + resident + temps

    # Batch tile sits on the lane axis -> multiple of 128; shrink until it
    # fits the VMEM budget with 2x headroom.
    TB = _round_up(min(block_b, max(B, 1)), 128)
    while TB > 128 and 2 * vmem_estimate(TB) > vmem_cap:
        TB = _round_up(max(128, TB // 2), 128)
    vmem_limit = int(min(max(2 * vmem_estimate(TB), 8 * 1024 * 1024), vmem_cap))

    Bp = _round_up(B, TB)
    xT = jnp.transpose(xs.astype(jnp.float32))                   # [D, B]
    if Bp != B:
        xT = jnp.zeros((D, Bp), jnp.float32).at[:, :B].set(xT)
    grid = (Bp // TB,)

    # TODO(synk): for large D*H, single-buffer the resident weights with
    # pipeline_mode=pl.Buffered(1) (constant index_map); at these sizes the
    # double-buffered copies are < 1 KiB, so the default is kept for safety.
    dxsT, negdivT = pl.pallas_call(
        _brute_force_divergence_kernel,
        out_shape=(jax.ShapeDtypeStruct((D, Bp), jnp.float32),
                   jax.ShapeDtypeStruct((1, Bp), jnp.float32)),
        grid=grid,
        in_specs=[
            pl.BlockSpec((D, TB), lambda i: (0, i)),   # x^T: streamed per tile
            pl.BlockSpec((H, D), lambda i: (0, 0)),    # W1^T: resident
            pl.BlockSpec((H, 1), lambda i: (0, 0)),    # bias_eff^T: resident
            pl.BlockSpec((D, H), lambda i: (0, 0)),    # W2^T: resident
            pl.BlockSpec((D, 1), lambda i: (0, 0)),    # b2^T: resident
            pl.BlockSpec((1, H), lambda i: (0, 0)),    # c: resident
        ],
        out_specs=(pl.BlockSpec((D, TB), lambda i: (0, i)),
                   pl.BlockSpec((1, TB), lambda i: (0, i))),
        compiler_params=pltpu.CompilerParams(
            dimension_semantics=("parallel",),
            vmem_limit_bytes=vmem_limit),
    )(xT, w1t, bias_eff, w2t, b2t, c)

    dxs = jnp.transpose(dxsT[:, :B])        # [B, D]
    neg_div = jnp.transpose(negdivT[:, :B])  # [B, 1]
    return dxs, neg_div


# ----------------------- pure-JAX reference (autodiff) -----------------------
def _dynamics_ref(params, t, x):
    h = jnp.tanh(x @ params["w1"] + params["b1"] + t * params["wt"])
    return h @ params["w2"] + params["b2"]


def _reference(params, t, xs):
    dxs = _dynamics_ref(params, t, xs)

    def per_sample_trace(x1):
        f = lambda x: _dynamics_ref(params, t, x[None, :])[0]
        jac = jax.jacrev(f)(x1)                      # [D, D]
        return jnp.trace(jac)

    div = jax.vmap(per_sample_trace)(xs)             # [B]
    return dxs, -div[:, None]


if __name__ == "__main__":
    key = jax.random.PRNGKey(0)
    B, D, H = 256, 4, 32      # small shapes; block_b=128 below -> grid of 2 tiles

    k1, k2, k3, k4, k5, k6 = jax.random.split(key, 6)
    params = {
        "w1": jax.random.normal(k1, (D, H), jnp.float32) * 0.3,
        "b1": jax.random.normal(k2, (1, H), jnp.float32) * 0.1,
        "wt": jax.random.normal(k3, (1, H), jnp.float32) * 0.1,
        "w2": jax.random.normal(k4, (H, D), jnp.float32) * 0.3,
        "b2": jax.random.normal(k5, (1, D), jnp.float32) * 0.1,
    }
    xs = jax.random.normal(k6, (B, D), jnp.float32)
    t = jnp.float32(0.37)

    dxs, neg_div = brute_force_estimator_fast(params, t, xs, block_b=128)
    jax.block_until_ready((dxs, neg_div))

    dxs_ref, neg_div_ref = _reference(params, t, xs)
    assert dxs.shape == (B, D) and neg_div.shape == (B, 1)
    assert jnp.allclose(dxs, dxs_ref, atol=1e-4, rtol=1e-4)
    assert jnp.allclose(neg_div, neg_div_ref, atol=1e-4, rtol=1e-4)

    print("KERNEL_OK")
</pallas_src>

<mosaic_0001>
module attributes {stable_mosaic.version = 11 : i64} {
  func.func @_brute_force_divergence_kernel(%arg0: i32, %arg1: memref<4x128xf32, #tpu.memory_space<vmem>>, %arg2: memref<32x4xf32, #tpu.memory_space<vmem>>, %arg3: memref<32x1xf32, #tpu.memory_space<vmem>>, %arg4: memref<4x32xf32, #tpu.memory_space<vmem>>, %arg5: memref<4x1xf32, #tpu.memory_space<vmem>>, %arg6: memref<1x32xf32, #tpu.memory_space<vmem>>, %arg7: memref<4x128xf32, #tpu.memory_space<vmem>>, %arg8: memref<1x128xf32, #tpu.memory_space<vmem>>) attributes {dimension_semantics = [#tpu.dimension_semantics<parallel>], iteration_bounds = array<i64: 2>, scalar_prefetch = 0 : i64, scratch_operands = 0 : i64, tpu.core_type = #tpu.core_type<tc>, window_params = [{transform_indices = @transform_0, window_bounds = array<i64: 4, 128>}, {pipeline_mode = #tpu.pipeline_mode<synchronous>, transform_indices = @transform_1, window_bounds = array<i64: 32, 4>}, {pipeline_mode = #tpu.pipeline_mode<synchronous>, transform_indices = @transform_2, window_bounds = array<i64: 32, 1>}, {pipeline_mode = #tpu.pipeline_mode<synchronous>, transform_indices = @transform_3, window_bounds = array<i64: 4, 32>}, {pipeline_mode = #tpu.pipeline_mode<synchronous>, transform_indices = @transform_4, window_bounds = array<i64: 4, 1>}, {pipeline_mode = #tpu.pipeline_mode<synchronous>, transform_indices = @transform_5, window_bounds = array<i64: 1, 32>}, {transform_indices = @transform_6, window_bounds = array<i64: 4, 128>}, {transform_indices = @transform_7, window_bounds = array<i64: 1, 128>}]} {
    %c0 = arith.constant 0 : index
    %c0_0 = arith.constant 0 : index
    %0 = vector.load %arg1[%c0, %c0_0] : memref<4x128xf32, #tpu.memory_space<vmem>>, vector<4x128xf32>
    %c0_1 = arith.constant 0 : index
    %c0_2 = arith.constant 0 : index
    %1 = vector.load %arg2[%c0_1, %c0_2] : memref<32x4xf32, #tpu.memory_space<vmem>>, vector<32x4xf32>
    %cst = arith.constant dense<0.000000e+00> : vector<32x128xf32>
    %2 = tpu.matmul %1, %0, %cst {dimension_numbers = #tpu.dot_dimension_numbers<[1], [0], [0], [1], [0, 0, 1, 1], [], []>} : vector<32x4xf32>, vector<4x128xf32>, vector<32x128xf32> -> vector<32x128xf32>
    %c0_3 = arith.constant 0 : index
    %c0_4 = arith.constant 0 : index
    %3 = vector.load %arg3[%c0_3, %c0_4] : memref<32x1xf32, #tpu.memory_space<vmem>>, vector<32x1xf32>
    %4 = vector.broadcast %3 : vector<32x1xf32> to vector<32x128xf32>
    %5 = arith.addf %2, %4 : vector<32x128xf32>
    %6 = math.tanh %5 : vector<32x128xf32>
    %c0_5 = arith.constant 0 : index
    %c0_6 = arith.constant 0 : index
    %7 = vector.load %arg4[%c0_5, %c0_6] : memref<4x32xf32, #tpu.memory_space<vmem>>, vector<4x32xf32>
    %cst_7 = arith.constant dense<0.000000e+00> : vector<4x128xf32>
    %8 = tpu.matmul %7, %6, %cst_7 {dimension_numbers = #tpu.dot_dimension_numbers<[1], [0], [0], [1], [0, 0, 1, 1], [], []>} : vector<4x32xf32>, vector<32x128xf32>, vector<4x128xf32> -> vector<4x128xf32>
    %c0_8 = arith.constant 0 : index
    %c0_9 = arith.constant 0 : index
    %9 = vector.load %arg5[%c0_8, %c0_9] : memref<4x1xf32, #tpu.memory_space<vmem>>, vector<4x1xf32>
    %10 = vector.broadcast %9 : vector<4x1xf32> to vector<4x128xf32>
    %11 = arith.addf %8, %10 : vector<4x128xf32>
    %c0_10 = arith.constant 0 : index
    %c0_11 = arith.constant 0 : index
    %12 = vector.load %arg7[%c0_10, %c0_11] : memref<4x128xf32, #tpu.memory_space<vmem>>, vector<4x128xf32>
    tpu.vector_store %arg7[%c0_10, %c0_11], %11 {strides = array<i32>} : memref<4x128xf32, #tpu.memory_space<vmem>>, vector<4x128xf32>,
    %13 = arith.mulf %6, %6 : vector<32x128xf32>
    %cst_12 = arith.constant 1.000000e+00 : f32
    %14 = vector.broadcast %cst_12 : f32 to vector<32x128xf32>
    %15 = arith.subf %14, %13 : vector<32x128xf32>
    %c0_13 = arith.constant 0 : index
    %c0_14 = arith.constant 0 : index
    %16 = vector.load %arg6[%c0_13, %c0_14] : memref<1x32xf32, #tpu.memory_space<vmem>>, vector<1x32xf32>
    %cst_15 = arith.constant dense<0.000000e+00> : vector<1x128xf32>
    %17 = tpu.matmul %16, %15, %cst_15 {dimension_numbers = #tpu.dot_dimension_numbers<[1], [0], [0], [1], [0, 0, 1, 1], [], []>} : vector<1x32xf32>, vector<32x128xf32>, vector<1x128xf32> -> vector<1x128xf32>
    %cst_16 = arith.constant 0.000000e+00 : f32
    %18 = vector.broadcast %cst_16 : f32 to vector<1x128xf32>
    %19 = arith.subf %18, %17 : vector<1x128xf32>
    %c0_17 = arith.constant 0 : index
    %c0_18 = arith.constant 0 : index
    %20 = vector.load %arg8[%c0_17, %c0_18] : memref<1x128xf32, #tpu.memory_space<vmem>>, vector<1x128xf32>
    tpu.vector_store %arg8[%c0_17, %c0_18], %19 {strides = array<i32>} : memref<1x128xf32, #tpu.memory_space<vmem>>, vector<1x128xf32>,
    return
  }
  func.func @transform_0(%arg0: i32) -> (i32, i32) {
    %c0_i32 = arith.constant 0 : i32
    %c0_i32_0 = arith.constant 0 : i32
    return %c0_i32, %arg0 : i32, i32
  }
  func.func @transform_1(%arg0: i32) -> (i32, i32) {
    %c0_i32 = arith.constant 0 : i32
    %c0_i32_0 = arith.constant 0 : i32
    %c0_i32_1 = arith.constant 0 : i32
    return %c0_i32, %c0_i32_0 : i32, i32
  }
  func.func @transform_2(%arg0: i32) -> (i32, i32) {
    %c0_i32 = arith.constant 0 : i32
    %c0_i32_0 = arith.constant 0 : i32
    %c0_i32_1 = arith.constant 0 : i32
    return %c0_i32, %c0_i32_0 : i32, i32
  }
  func.func @transform_3(%arg0: i32) -> (i32, i32) {
    %c0_i32 = arith.constant 0 : i32
    %c0_i32_0 = arith.constant 0 : i32
    %c0_i32_1 = arith.constant 0 : i32
    return %c0_i32, %c0_i32_0 : i32, i32
  }
  func.func @transform_4(%arg0: i32) -> (i32, i32) {
    %c0_i32 = arith.constant 0 : i32
    %c0_i32_0 = arith.constant 0 : i32
    %c0_i32_1 = arith.constant 0 : i32
    return %c0_i32, %c0_i32_0 : i32, i32
  }
  func.func @transform_5(%arg0: i32) -> (i32, i32) {
    %c0_i32 = arith.constant 0 : i32
    %c0_i32_0 = arith.constant 0 : i32
    %c0_i32_1 = arith.constant 0 : i32
    return %c0_i32, %c0_i32_0 : i32, i32
  }
  func.func @transform_6(%arg0: i32) -> (i32, i32) {
    %c0_i32 = arith.constant 0 : i32
    %c0_i32_0 = arith.constant 0 : i32
    return %c0_i32, %arg0 : i32, i32
  }
  func.func @transform_7(%arg0: i32) -> (i32, i32) {
    %c0_i32 = arith.constant 0 : i32
    %c0_i32_0 = arith.constant 0 : i32
    return %c0_i32, %arg0 : i32, i32
  }
}

</mosaic_0001>

<llo_original>
// kernel: tpu_custom_call.1
$region0: #{tpu_custom_call.1}
  #allocation0 [shape = 'u32[]', space=smem, size = 0x4, offset = 0x4, fixed_abs, tag = 'smem constant byte address 0x4 - core index']
  #allocation1 [shape = 'u32[144,128]{1,0:T(1,128)}', space=vmem, size = 0x12000, scoped, tag = 'internal scratch']
  %s0 = inlined_call_operand.vmem [shape: f32[4,256], index: 0, kind: input, shape index: {}]
  %s1 = inlined_call_operand.vmem [shape: f32[32,4], index: 1, kind: input, shape index: {}]
  %s2 = inlined_call_operand.vmem [shape: f32[32,1], index: 2, kind: input, shape index: {}]
  %s3 = inlined_call_operand.vmem [shape: f32[4,32], index: 3, kind: input, shape index: {}]
  %s4 = inlined_call_operand.vmem [shape: f32[4,1], index: 4, kind: input, shape index: {}]
  %s5 = inlined_call_operand.vmem [shape: f32[1,32], index: 5, kind: input, shape index: {}]
  %s6 = inlined_call_operand.hbm [shape: f32[4,256], index: 6, kind: output, shape index: {0}]
  %s7 = inlined_call_operand.hbm [shape: f32[1,256], index: 7, kind: output, shape index: {1}]
  %8 = xla_tuple %s6, %s7
  %s9 = sld [smem:[#allocation0]]
  $region65: #{tpu_custom_call.1} parent=0
    _
  %s11 = ssub.s32 1, %s9
  %s12 = scalar_select 0, %s11, %s9
  $region1: #{tpu_custom_call.1} parent=0
    #allocation2 [shape = 'u8[4096]{0}', space=vmem, size = 0x1000, scoped, tag = 'output window, operand 0']
    #allocation3 [shape = 's32[2]{0}', space=sflag, size = 0x8, scoped, tag = 'scoped memory for tpu_custom_call.1']
    #allocation4 [shape = 'u8[1024]{0}', space=vmem, size = 0x400, scoped, tag = 'output window, operand 1']
    #allocation5 [shape = 's32[2]{0}', space=sflag, size = 0x8, scoped, tag = 'scoped memory for tpu_custom_call.1']
    %13 = vsyncpa [#allocation3], 0
    %s14 = scalar_lea.sflag [#allocation3], 1
    %15 = vsyncpa %s14, 0
    %16 = vsyncpa [#allocation5], 0
    %s17 = scalar_lea.sflag [#allocation5], 1
    %18 = vsyncpa %s17, 0
    loop: start=0, step=1, limit=4
    $region2: #{tpu_custom_call.1} parent=1 // loop_pre_header
      _
    $region3: #{tpu_custom_call.1} parent=1 // loop_header
      %s20 = sphi 0, %s24
      %p21 = scmp.ge.s32.totalorder %s20, 4
      %s30 = sphi 0, %s32
      %s33 = sphi 0, %s30
      %s34 = sphi 0, %s33
      %s50 = sphi 0, %s34
      %s54 = sphi 0, %s54
      %s56 = sphi 0, %s54
      %s57 = sphi 0, %s56
      %s71 = sphi 0, %s57
      %s75 = sphi 0, %s75
      %s77 = sphi 0, %s75
      %s78 = sphi 0, %s77
      %s92 = sphi 0, %s78
      %s96 = sphi 0, %s96
      %s98 = sphi 0, %s96
      %s99 = sphi 0, %s98
      %s113 = sphi 0, %s99
      %s117 = sphi 0, %s117
      %s119 = sphi 0, %s117
      %s120 = sphi 0, %s119
      %s134 = sphi 0, %s120
      %s138 = sphi 0, %s138
      %s140 = sphi 0, %s138
      %s141 = sphi 0, %s140
      %s155 = sphi 0, %s141
      %s161 = sphi 0, %s163
      %s164 = sphi 0, %s161
      %s165 = sphi 0, %s164
      %s181 = sphi 0, %s165
      %s187 = sphi 0, %s189
      %s190 = sphi 0, %s187
      %s191 = sphi 0, %s190
      %s207 = sphi 0, %s191
    $region4: #{tpu_custom_call.1} parent=1 // loop_header_branch
      %23 = sbr.rel (%p21) target = $region8
    $region5: #{tpu_custom_call.1} parent=1 // loop_body
      %s25 = ssub.s32 %s20, 1
      %s26 = ssub.s32 %s20, 2
      %s27 = sadd.s32 %s20, 1
      %s28 = ssub.s32 %s20, %s27
      %p29 = scmp.eq.s32.totalorder %s28, 0
      %s31 = sadd.s32 %s30, 1
      %s32 = scalar_select %p29, %s30, %s31
      %p35 = pneg %p29
      %p36 = scmp.eq.s32.totalorder %s20, 1
      %p37 = por %p35, %p36
      %p38 = scmp.ne.s32.totalorder %s30, %s33
      %p39 = scmp.eq.s32.totalorder %s20, 0
      %p40 = por %p38, %p39
      %p41 = scmp.ne.s32.totalorder %s30, %s33
      %p42 = scmp.eq.s32.totalorder %s25, 1
      %p43 = por %p41, %p42
      %p44 = scmp.ne.s32.totalorder %s33, %s34
      %p45 = scmp.eq.s32.totalorder %s25, 0
      %p46 = por %p44, %p45
      %p47 = scmp.ne.s32.totalorder %s33, %s34
      %p48 = scmp.eq.s32.totalorder %s26, 1
      %p49 = por %p47, %p48
      %p51 = scmp.ne.s32.totalorder %s34, %s50
      %p52 = scmp.eq.s32.totalorder %s26, 0
      %p53 = por %p51, %p52
      %s55 = sadd.s32 %s54, 1
      %p58 = scmp.eq.s32.totalorder %s20, 1
      %p59 = scmp.ne.s32.totalorder %s54, %s56
      %p60 = scmp.eq.s32.totalorder %s20, 0
      %p61 = por %p59, %p60
      %p62 = scmp.ne.s32.totalorder %s54, %s56
      %p63 = scmp.eq.s32.totalorder %s25, 1
      %p64 = por %p62, %p63
      %p65 = scmp.ne.s32.totalorder %s56, %s57
      %p66 = scmp.eq.s32.totalorder %s25, 0
      %p67 = por %p65, %p66
      %p68 = scmp.ne.s32.totalorder %s56, %s57
      %p69 = scmp.eq.s32.totalorder %s26, 1
      %p70 = por %p68, %p69
      %p72 = scmp.ne.s32.totalorder %s57, %s71
      %p73 = scmp.eq.s32.totalorder %s26, 0
      %p74 = por %p72, %p73
      %s76 = sadd.s32 %s75, 1
      %p79 = scmp.eq.s32.totalorder %s20, 1
      %p80 = scmp.ne.s32.totalorder %s75, %s77
      %p81 = scmp.eq.s32.totalorder %s20, 0
      %p82 = por %p80, %p81
      %p83 = scmp.ne.s32.totalorder %s75, %s77
      %p84 = scmp.eq.s32.totalorder %s25, 1
      %p85 = por %p83, %p84
      %p86 = scmp.ne.s32.totalorder %s77, %s78
      %p87 = scmp.eq.s32.totalorder %s25, 0
      %p88 = por %p86, %p87
      %p89 = scmp.ne.s32.totalorder %s77, %s78
      %p90 = scmp.eq.s32.totalorder %s26, 1
      %p91 = por %p89, %p90
      %p93 = scmp.ne.s32.totalorder %s78, %s92
      %p94 = scmp.eq.s32.totalorder %s26, 0
      %p95 = por %p93, %p94
      %s97 = sadd.s32 %s96, 1
      %p100 = scmp.eq.s32.totalorder %s20, 1
      %p101 = scmp.ne.s32.totalorder %s96, %s98
      %p102 = scmp.eq.s32.totalorder %s20, 0
      %p103 = por %p101, %p102
      %p104 = scmp.ne.s32.totalorder %s96, %s98
      %p105 = scmp.eq.s32.totalorder %s25, 1
      %p106 = por %p104, %p105
      %p107 = scmp.ne.s32.totalorder %s98, %s99
      %p108 = scmp.eq.s32.totalorder %s25, 0
      %p109 = por %p107, %p108
      %p110 = scmp.ne.s32.totalorder %s98, %s99
      %p111 = scmp.eq.s32.totalorder %s26, 1
      %p112 = por %p110, %p111
      %p114 = scmp.ne.s32.totalorder %s99, %s113
      %p115 = scmp.eq.s32.totalorder %s26, 0
      %p116 = por %p114, %p115
      %s118 = sadd.s32 %s117, 1
      %p121 = scmp.eq.s32.totalorder %s20, 1
      %p122 = scmp.ne.s32.totalorder %s117, %s119
      %p123 = scmp.eq.s32.totalorder %s20, 0
      %p124 = por %p122, %p123
      %p125 = scmp.ne.s32.totalorder %s117, %s119
      %p126 = scmp.eq.s32.totalorder %s25, 1
      %p127 = por %p125, %p126
      %p128 = scmp.ne.s32.totalorder %s119, %s120
      %p129 = scmp.eq.s32.totalorder %s25, 0
      %p130 = por %p128, %p129
      %p131 = scmp.ne.s32.totalorder %s119, %s120
      %p132 = scmp.eq.s32.totalorder %s26, 1
      %p133 = por %p131, %p132
      %p135 = scmp.ne.s32.totalorder %s120, %s134
      %p136 = scmp.eq.s32.totalorder %s26, 0
      %p137 = por %p135, %p136
      %s139 = sadd.s32 %s138, 1
      %p142 = scmp.eq.s32.totalorder %s20, 1
      %p143 = scmp.ne.s32.totalorder %s138, %s140
      %p144 = scmp.eq.s32.totalorder %s20, 0
      %p145 = por %p143, %p144
      %p146 = scmp.ne.s32.totalorder %s138, %s140
      %p147 = scmp.eq.s32.totalorder %s25, 1
      %p148 = por %p146, %p147
      %p149 = scmp.ne.s32.totalorder %s140, %s141
      %p150 = scmp.eq.s32.totalorder %s25, 0
      %p151 = por %p149, %p150
      %p152 = scmp.ne.s32.totalorder %s140, %s141
      %p153 = scmp.eq.s32.totalorder %s26, 1
      %p154 = por %p152, %p153
      %p156 = scmp.ne.s32.totalorder %s141, %s155
      %p157 = scmp.eq.s32.totalorder %s26, 0
      %p158 = por %p156, %p157
      %s159 = ssub.s32 %s20, %s27
      %p160 = scmp.eq.s32.totalorder %s159, 0
      %s162 = sadd.s32 %s161, 1
      %s163 = scalar_select %p160, %s161, %s162
      %p166 = pneg %p160
      %p167 = scmp.eq.s32.totalorder %s20, 1
      %p168 = por %p166, %p167
      %p169 = scmp.ne.s32.totalorder %s161, %s164
      %p170 = scmp.eq.s32.totalorder %s20, 0
      %p171 = por %p169, %p170
      %p172 = scmp.ne.s32.totalorder %s161, %s164
      %p173 = scmp.eq.s32.totalorder %s25, 1
      %p174 = por %p172, %p173
      %p175 = scmp.ne.s32.totalorder %s164, %s165
      %p176 = scmp.eq.s32.totalorder %s25, 0
      %p177 = por %p175, %p176
      %p178 = scmp.ne.s32.totalorder %s164, %s165
      %p179 = scmp.eq.s32.totalorder %s26, 1
      %p180 = por %p178, %p179
      %p182 = scmp.ne.s32.totalorder %s165, %s181
      %p183 = scmp.eq.s32.totalorder %s26, 0
      %p184 = por %p182, %p183
      %s185 = ssub.s32 %s20, %s27
      %p186 = scmp.eq.s32.totalorder %s185, 0
      %s188 = sadd.s32 %s187, 1
      %s189 = scalar_select %p186, %s187, %s188
      %p192 = pneg %p186
      %p193 = scmp.eq.s32.totalorder %s20, 1
      %p194 = por %p192, %p193
      %p195 = scmp.ne.s32.totalorder %s187, %s190
      %p196 = scmp.eq.s32.totalorder %s20, 0
      %p197 = por %p195, %p196
      %p198 = scmp.ne.s32.totalorder %s187, %s190
      %p199 = scmp.eq.s32.totalorder %s25, 1
      %p200 = por %p198, %p199
      %p201 = scmp.ne.s32.totalorder %s190, %s191
      %p202 = scmp.eq.s32.totalorder %s25, 0
      %p203 = por %p201, %p202
      %p204 = scmp.ne.s32.totalorder %s190, %s191
      %p205 = scmp.eq.s32.totalorder %s26, 1
      %p206 = por %p204, %p205
      %p208 = scmp.ne.s32.totalorder %s191, %s207
      %p209 = scmp.eq.s32.totalorder %s26, 0
      %p210 = por %p208, %p209
      %p211 = scmp.le.s32.totalorder 1, %s20
      %p212 = scmp.lt.s32.totalorder %s20, 3
      %p213 = pnand %p211, %p212
      %p214 = pneg %p213
      // Predicated region
      $region9: #{tpu_custom_call.1} parent=5 // pred_check
        _
      $region10: #{tpu_custom_call.1} parent=5 // pred_check_branch
        %216 = sbr.rel (%p213) target = $region12
      $region11: #{tpu_custom_call.1} parent=5 // pred_region
        %s217 = ssub.s32 %s20, 1
        // Predicated region
        $region13: #{tpu_custom_call.1} parent=11 // pred_check
          %p218 = pneg %p67
        $region14: #{tpu_custom_call.1} parent=11 // pred_check_branch
          %220 = sbr.rel (%p218) target = $region16
        $region15: #{tpu_custom_call.1} parent=11 // pred_region
          _
        $region16: #{tpu_custom_call.1} parent=11 // pred_fallthru
          _
        // Predicated region
        $region17: #{tpu_custom_call.1} parent=11 // pred_check
          %p221 = pneg %p88
        $region18: #{tpu_custom_call.1} parent=11 // pred_check_branch
          %223 = sbr.rel (%p221) target = $region20
        $region19: #{tpu_custom_call.1} parent=11 // pred_region
          _
        $region20: #{tpu_custom_call.1} parent=11 // pred_fallthru
          _
        // Predicated region
        $region21: #{tpu_custom_call.1} parent=11 // pred_check
          %p224 = pneg %p109
        $region22: #{tpu_custom_call.1} parent=11 // pred_check_branch
          %226 = sbr.rel (%p224) target = $region24
        $region23: #{tpu_custom_call.1} parent=11 // pred_region
          _
        $region24: #{tpu_custom_call.1} parent=11 // pred_fallthru
          _
        // Predicated region
        $region25: #{tpu_custom_call.1} parent=11 // pred_check
          %p227 = pneg %p130
        $region26: #{tpu_custom_call.1} parent=11 // pred_check_branch
          %229 = sbr.rel (%p227) target = $region28
        $region27: #{tpu_custom_call.1} parent=11 // pred_region
          _
        $region28: #{tpu_custom_call.1} parent=11 // pred_fallthru
          _
        // Predicated region
        $region29: #{tpu_custom_call.1} parent=11 // pred_check
          %p230 = pneg %p151
        $region30: #{tpu_custom_call.1} parent=11 // pred_check_branch
          %232 = sbr.rel (%p230) target = $region32
        $region31: #{tpu_custom_call.1} parent=11 // pred_region
          _
        $region32: #{tpu_custom_call.1} parent=11 // pred_fallthru
          _
      $region12: #{tpu_custom_call.1} parent=5 // pred_fallthru
        _
      %p233 = scmp.lt.s32.totalorder %s20, 2
      // Predicated region
      $region33: #{tpu_custom_call.1} parent=5 // pred_check
        %p234 = pneg %p233
      $region34: #{tpu_custom_call.1} parent=5 // pred_check_branch
        %236 = sbr.rel (%p234) target = $region36
      $region35: #{tpu_custom_call.1} parent=5 // pred_region
        // Predicated region
        $region37: #{tpu_custom_call.1} parent=35 // pred_check
          %p237 = pneg %p40
        $region38: #{tpu_custom_call.1} parent=35 // pred_check_branch
          %239 = sbr.rel (%p237) target = $region40
        $region39: #{tpu_custom_call.1} parent=35 // pred_region
          %p240 = scmp.lt.s32.totalorder %s20, 1
          %s241 = scalar_select %p240, %s20, 1
          %s242 = smul.addr %s241, 4
          %s243 = scalar_lea.vmem %s0, %s242
        $region40: #{tpu_custom_call.1} parent=35 // pred_fallthru
          _
      $region36: #{tpu_custom_call.1} parent=5 // pred_fallthru
        _
      %p244 = scmp.le.s32.totalorder 1, %s20
      %p245 = scmp.lt.s32.totalorder %s20, 3
      %p246 = pnand %p244, %p245
      %p247 = pneg %p246
      // Predicated region
      $region41: #{tpu_custom_call.1} parent=5 // pred_check
        _
      $region42: #{tpu_custom_call.1} parent=5 // pred_check_branch
        %249 = sbr.rel (%p246) target = $region44
      $region43: #{tpu_custom_call.1} parent=5 // pred_region
        %s250 = ssub.s32 %s20, 1
        %p251 = scmp.lt.s32.totalorder %s25, 1
        %s252 = scalar_select %p251, %s25, 1
        %s253 = smul.addr %s252, 4
        %s254 = scalar_lea.vmem %s0, %s253
        %p255 = pneg %p46
        %p256 = pneg %p43
        %p257 = pneg %p67
        %p258 = pneg %p64
        %p259 = pneg %p88
        %p260 = pneg %p85
        %p261 = pneg %p109
        %p262 = pneg %p106
        %p263 = pneg %p130
        %p264 = pneg %p127
        %p265 = pneg %p151
        %p266 = pneg %p148
        %p267 = pneg %p177
        %p268 = pneg %p174
        %s269 = sand.u32 %s164, 1
        %s270 = scalar_lea.sflag [#allocation3], %s269
        %s271 = sand.u32 %s164, 1
        %s272 = smul.addr %s271, 4
        %s273 = scalar_lea.vmem [#allocation2], %s272
        %p274 = pneg %p203
        %p275 = pneg %p200
        %s276 = sand.u32 %s190, 1
        %s277 = scalar_lea.sflag [#allocation5], %s276
        %s278 = sand.u32 %s190, 1
        %s279 = scalar_lea.vmem [#allocation4], %s278
        %p280 = scmp.lt.s32.totalorder %s25, 1
        %s281 = scalar_select %p280, %s25, 1
        %s282 = smul.addr %s281, 4
        %s283 = scalar_lea.vmem %s0, %s282
        %v284 = vld [vmem:[%s283] sm:$0xf]
        %v285 = vld [vmem:[%s1] sm:$0xff]
        %v286 = vld [vmem:[%s1 + $0x8] sm:$0xff]
        %v287 = vld [vmem:[%s1 + $0x10] sm:$0xff]
        %v288 = vld [vmem:[%s1 + $0x18] sm:$0xff]
        %v289 = vld [vmem:[%s2] sm:$0xff]
        %v290 = vld [vmem:[%s2 + $0x8] sm:$0xff]
        %v291 = vld [vmem:[%s2 + $0x10] sm:$0xff]
        %v292 = vld [vmem:[%s2 + $0x18] sm:$0xff]
        %294 = vset.pattern.permute.xlu0 0
        %295 = vperm.xlu0 %294, %v289
        %v296 = vpop.permute.xlu0 %295
        %299 = vset.pattern.permute.xlu0 0
        %300 = vperm.xlu0 %299, %v290
        %v301 = vpop.permute.xlu0 %300
        %304 = vset.pattern.permute.xlu0 0
        %305 = vperm.xlu0 %304, %v291
        %v306 = vpop.permute.xlu0 %305
        %309 = vset.pattern.permute.xlu0 0
        %310 = vperm.xlu0 %309, %v292
        %v311 = vpop.permute.xlu0 %310
        %vm313 = vcmask 31744
        %v315 = vsel %vm313, %v285, 0
        %v318 = vsel %vm313, %v286, 0
        %v321 = vsel %vm313, %v287, 0
        %v324 = vsel %vm313, %v288, 0
        %vm326 = vcmask 1043456
        %v328 = vsel %vm326, %v284, 0
        %330 = vmatprep.subr.mxu0 0.0
        %331 = vmatpush1.msra.mxu0 0.0
        %332 = vmatprep.subr.mxu0 0.0
        %333 = vmatpush1.msra.mxu0 0.0
        %334 = vmatprep.subr.mxu0 0.0
        %335 = vmatpush1.msra.mxu0 0.0
        %336 = vmatprep.subr.mxu0 0.0
        %337 = vmatpush1.msra.mxu0 0.0
        %338 = vmatprep.subr.mxu0 0.0
        %339 = vmatpush1.msra.mxu0 0.0
        %340 = vmatprep.subr.mxu0 0.0
        %341 = vmatpush1.msra.mxu0 0.0
        %342 = vmatprep.subr.mxu0 0.0
        %343 = vmatpush1.msra.mxu0 0.0
        %344 = vmatprep.subr.mxu0 0.0
        %345 = vmatpush1.msra.mxu0 0.0
        %346 = vmatprep.subr.mxu0 0.0
        %347 = vmatpush1.msra.mxu0 0.0
        %348 = vmatprep.subr.mxu0 0.0
        %349 = vmatpush1.msra.mxu0 0.0
        %350 = vmatprep.subr.mxu0 0.0
        %351 = vmatpush1.msra.mxu0 0.0
        %352 = vmatprep.subr.mxu0 0.0
        %353 = vmatpush1.msra.mxu0 0.0
        %354 = vmatprep.subr.mxu0 0.0
        %355 = vmatpush1.msra.mxu0 0.0
        %356 = vmatprep.subr.mxu0 0.0
        %357 = vmatpush1.msra.mxu0 0.0
        %358 = vmatprep.subr.mxu0 0.0
        %359 = vmatpush1.msra.mxu0 0.0
        %360 = vmatprep.subr.mxu0 0.0
        %361 = vmatpush1.msra.mxu0 %v328
        %362 = vmatprep.subr.mxu0 0.0
        %363 = vmatpush2.msra.mxu0 0.0
        %364 = vmatprep.subr.mxu0 0.0
        %365 = vmatpush2.msra.mxu0 0.0
        %366 = vmatprep.subr.mxu0 0.0
        %367 = vmatpush2.msra.mxu0 0.0
        %368 = vmatprep.subr.mxu0 0.0
        %369 = vmatpush2.msra.mxu0 0.0
        %370 = vmatprep.subr.mxu0 0.0
        %371 = vmatpush2.msra.mxu0 0.0
        %372 = vmatprep.subr.mxu0 0.0
        %373 = vmatpush2.msra.mxu0 0.0
        %374 = vmatprep.subr.mxu0 0.0
        %375 = vmatpush2.msra.mxu0 0.0
        %376 = vmatprep.subr.mxu0 0.0
        %377 = vmatpush2.msra.mxu0 0.0
        %378 = vmatprep.subr.mxu0 0.0
        %379 = vmatpush2.msra.mxu0 0.0
        %380 = vmatprep.subr.mxu0 0.0
        %381 = vmatpush2.msra.mxu0 0.0
        %382 = vmatprep.subr.mxu0 0.0
        %383 = vmatpush2.msra.mxu0 0.0
        %384 = vmatprep.subr.mxu0 0.0
        %385 = vmatpush2.msra.mxu0 0.0
        %386 = vmatprep.subr.mxu0 0.0
        %387 = vmatpush2.msra.mxu0 0.0
        %388 = vmatprep.subr.mxu0 0.0
        %389 = vmatpush2.msra.mxu0 0.0
        %390 = vmatprep.subr.mxu0 0.0
        %391 = vmatpush2.msra.mxu0 0.0
        %392 = vmatprep.subr.mxu0 0.0
        %393 = vmatpush2.msra.mxu0 0.0
        %394 = vmatprep.mubr.f32.mxu0 0.0
        %395 = vmatmul.mubr.f32.gmra.mxu0 %v315
        %v396 = vpop.f32.mrf.mxu0
        %v397 = vadd.f32 %v296, %v396
        %v398 = vpop.f32.mrf.mxu0
        %399 = vmatprep.mubr.f32.mxu0 0.0
        %400 = vmatmul.mubr.f32.gmra.mxu0 %v318
        %v401 = vpop.f32.mrf.mxu0
        %v402 = vadd.f32 %v301, %v401
        %v403 = vpop.f32.mrf.mxu0
        %404 = vmatprep.mubr.f32.mxu0 0.0
        %405 = vmatmul.mubr.f32.gmra.mxu0 %v321
        %v406 = vpop.f32.mrf.mxu0
        %v407 = vadd.f32 %v306, %v406
        %v408 = vpop.f32.mrf.mxu0
        %409 = vmatprep.mubr.f32.mxu0 0.0
        %410 = vmatmul.mubr.f32.gmra.mxu0 %v324
        %v411 = vpop.f32.mrf.mxu0
        %v412 = vadd.f32 %v311, %v411
        %v413 = vpop.f32.mrf.mxu0
        %414 = vdwg.mxu0
        %v415 = vtanh.pop %v397
        %v416 = vtanh.pop %v402
        %v417 = vtanh.pop %v407
        %v418 = vtanh.pop %v412
        %v419 = vld [vmem:[%s3] sm:$0xf]
        %v420 = vld [vmem:[%s4] sm:$0xf]
        %422 = vset.pattern.permute.xlu0 0
        %423 = vperm.xlu0 %422, %v420
        %v424 = vpop.permute.xlu0 %423
        %vm426 = vcmask 261120
        %v428 = vsel %vm426, %v419, 0
        %430 = vmatprep.subr.mxu0 0.0
        %431 = vmatpush1.msra.mxu0 0.0
        %432 = vmatprep.subr.mxu0 0.0
        %433 = vmatpush1.msra.mxu0 0.0
        %434 = vmatprep.subr.mxu0 0.0
        %435 = vmatpush1.msra.mxu0 0.0
        %436 = vmatprep.subr.mxu0 0.0
        %437 = vmatpush1.msra.mxu0 0.0
        %438 = vmatprep.subr.mxu0 0.0
        %439 = vmatpush1.msra.mxu0 0.0
        %440 = vmatprep.subr.mxu0 0.0
        %441 = vmatpush1.msra.mxu0 0.0
        %442 = vmatprep.subr.mxu0 0.0
        %443 = vmatpush1.msra.mxu0 0.0
        %444 = vmatprep.subr.mxu0 0.0
        %445 = vmatpush1.msra.mxu0 0.0
        %446 = vmatprep.subr.mxu0 0.0
        %447 = vmatpush1.msra.mxu0 0.0
        %448 = vmatprep.subr.mxu0 0.0
        %449 = vmatpush1.msra.mxu0 0.0
        %450 = vmatprep.subr.mxu0 0.0
        %451 = vmatpush1.msra.mxu0 0.0
        %452 = vmatprep.subr.mxu0 0.0
        %453 = vmatpush1.msra.mxu0 0.0
        %454 = vmatprep.subr.mxu0 0.0
        %455 = vmatpush1.msra.mxu0 %v418
        %456 = vmatprep.subr.mxu0 0.0
        %457 = vmatpush1.msra.mxu0 %v417
        %458 = vmatprep.subr.mxu0 0.0
        %459 = vmatpush1.msra.mxu0 %v416
        %460 = vmatprep.subr.mxu0 0.0
        %461 = vmatpush1.msra.mxu0 %v415
        %462 = vmatprep.subr.mxu0 0.0
        %463 = vmatpush2.msra.mxu0 0.0
        %464 = vmatprep.subr.mxu0 0.0
        %465 = vmatpush2.msra.mxu0 0.0
        %466 = vmatprep.subr.mxu0 0.0
        %467 = vmatpush2.msra.mxu0 0.0
        %468 = vmatprep.subr.mxu0 0.0
        %469 = vmatpush2.msra.mxu0 0.0
        %470 = vmatprep.subr.mxu0 0.0
        %471 = vmatpush2.msra.mxu0 0.0
        %472 = vmatprep.subr.mxu0 0.0
        %473 = vmatpush2.msra.mxu0 0.0
        %474 = vmatprep.subr.mxu0 0.0
        %475 = vmatpush2.msra.mxu0 0.0
        %476 = vmatprep.subr.mxu0 0.0
        %477 = vmatpush2.msra.mxu0 0.0
        %478 = vmatprep.subr.mxu0 0.0
        %479 = vmatpush2.msra.mxu0 0.0
        %480 = vmatprep.subr.mxu0 0.0
        %481 = vmatpush2.msra.mxu0 0.0
        %482 = vmatprep.subr.mxu0 0.0
        %483 = vmatpush2.msra.mxu0 0.0
        %484 = vmatprep.subr.mxu0 0.0
        %485 = vmatpush2.msra.mxu0 0.0
        %486 = vmatprep.subr.mxu0 0.0
        %487 = vmatpush2.msra.mxu0 0.0
        %488 = vmatprep.subr.mxu0 0.0
        %489 = vmatpush2.msra.mxu0 0.0
        %490 = vmatprep.subr.mxu0 0.0
        %491 = vmatpush2.msra.mxu0 0.0
        %492 = vmatprep.subr.mxu0 0.0
        %493 = vmatpush2.msra.mxu0 0.0
        %494 = vmatprep.mubr.f32.mxu0 0.0
        %495 = vmatmul.mubr.f32.gmra.mxu0 %v428
        %v496 = vpop.f32.mrf.mxu0
        %v497 = vadd.f32 %v424, %v496
        %v498 = vpop.f32.mrf.mxu0
        %499 = vdwg.mxu0
        %500 = vst [vmem:[%s273] sm:$0xf] %v497
        %v501 = vmul.f32 %v415, %v415
        %v502 = vmul.f32 %v416, %v416
        %v503 = vmul.f32 %v417, %v417
        %v504 = vmul.f32 %v418, %v418
        %v505 = vsub.f32 1.0, %v501
        %v506 = vsub.f32 1.0, %v502
        %v507 = vsub.f32 1.0, %v503
        %v508 = vsub.f32 1.0, %v504
        %v509 = vld [vmem:[%s5] sm:$0x1]
        %v511 = vsel %vm426, %v509, 0
        %513 = vmatprep.subr.mxu0 0.0
        %514 = vmatpush1.msra.mxu0 0.0
        %515 = vmatprep.subr.mxu0 0.0
        %516 = vmatpush1.msra.mxu0 0.0
        %517 = vmatprep.subr.mxu0 0.0
        %518 = vmatpush1.msra.mxu0 0.0
        %519 = vmatprep.subr.mxu0 0.0
        %520 = vmatpush1.msra.mxu0 0.0
        %521 = vmatprep.subr.mxu0 0.0
        %522 = vmatpush1.msra.mxu0 0.0
        %523 = vmatprep.subr.mxu0 0.0
        %524 = vmatpush1.msra.mxu0 0.0
        %525 = vmatprep.subr.mxu0 0.0
        %526 = vmatpush1.msra.mxu0 0.0
        %527 = vmatprep.subr.mxu0 0.0
        %528 = vmatpush1.msra.mxu0 0.0
        %529 = vmatprep.subr.mxu0 0.0
        %530 = vmatpush1.msra.mxu0 0.0
        %531 = vmatprep.subr.mxu0 0.0
        %532 = vmatpush1.msra.mxu0 0.0
        %533 = vmatprep.subr.mxu0 0.0
        %534 = vmatpush1.msra.mxu0 0.0
        %535 = vmatprep.subr.mxu0 0.0
        %536 = vmatpush1.msra.mxu0 0.0
        %537 = vmatprep.subr.mxu0 0.0
        %538 = vmatpush1.msra.mxu0 %v508
        %539 = vmatprep.subr.mxu0 0.0
        %540 = vmatpush1.msra.mxu0 %v507
        %541 = vmatprep.subr.mxu0 0.0
        %542 = vmatpush1.msra.mxu0 %v506
        %543 = vmatprep.subr.mxu0 0.0
        %544 = vmatpush1.msra.mxu0 %v505
        %545 = vmatprep.subr.mxu0 0.0
        %546 = vmatpush2.msra.mxu0 0.0
        %547 = vmatprep.subr.mxu0 0.0
        %548 = vmatpush2.msra.mxu0 0.0
        %549 = vmatprep.subr.mxu0 0.0
        %550 = vmatpush2.msra.mxu0 0.0
        %551 = vmatprep.subr.mxu0 0.0
        %552 = vmatpush2.msra.mxu0 0.0
        %553 = vmatprep.subr.mxu0 0.0
        %554 = vmatpush2.msra.mxu0 0.0
        %555 = vmatprep.subr.mxu0 0.0
        %556 = vmatpush2.msra.mxu0 0.0
        %557 = vmatprep.subr.mxu0 0.0
        %558 = vmatpush2.msra.mxu0 0.0
        %559 = vmatprep.subr.mxu0 0.0
        %560 = vmatpush2.msra.mxu0 0.0
        %561 = vmatprep.subr.mxu0 0.0
        %562 = vmatpush2.msra.mxu0 0.0
        %563 = vmatprep.subr.mxu0 0.0
        %564 = vmatpush2.msra.mxu0 0.0
        %565 = vmatprep.subr.mxu0 0.0
        %566 = vmatpush2.msra.mxu0 0.0
        %567 = vmatprep.subr.mxu0 0.0
        %568 = vmatpush2.msra.mxu0 0.0
        %569 = vmatprep.subr.mxu0 0.0
        %570 = vmatpush2.msra.mxu0 0.0
        %571 = vmatprep.subr.mxu0 0.0
        %572 = vmatpush2.msra.mxu0 0.0
        %573 = vmatprep.subr.mxu0 0.0
        %574 = vmatpush2.msra.mxu0 0.0
        %575 = vmatprep.subr.mxu0 0.0
        %576 = vmatpush2.msra.mxu0 0.0
        %577 = vmatprep.mubr.f32.mxu0 0.0
        %578 = vmatmul.mubr.f32.gmra.mxu0 %v511
        %v579 = vpop.f32.mrf.mxu0
        %v580 = vadd.f32 0.0, %v579
        %v581 = vpop.f32.mrf.mxu0
        %582 = vdwg.mxu0
        %v583 = vsub.f32 0.0, %v580
        %584 = vst [vmem:[%s279] sm:$0x1] %v583
        %s585 = sand.u32 %s164, 1
        %s586 = scalar_lea.sflag [#allocation3], %s585
        %s587 = sand.u32 %s164, 1
        %s588 = smul.addr %s587, 4
        %s589 = scalar_lea.vmem [#allocation2], %s588
        %s590 = sand.u32 %s190, 1
        %s591 = scalar_lea.sflag [#allocation5], %s590
        %s592 = sand.u32 %s190, 1
        %s593 = scalar_lea.vmem [#allocation4], %s592
        // Predicated region
        $region45: #{tpu_custom_call.1} parent=43 // pred_check
          %p594 = pneg %p174
        $region46: #{tpu_custom_call.1} parent=43 // pred_check_branch
          %596 = sbr.rel (%p594) target = $region48
        $region47: #{tpu_custom_call.1} parent=43 // pred_region
          %s598 = ssub.s32 64, 64
          %599 = vsyncadd %s586, %s598
          %s600 = smul.addr %s25, 64
          %s601 = scalar_lea.hbm %s6, %s600
          %s603 = sshll.u32 %s589, 4
          %s604 = int_to_ptr.vmem [resolvable:$true] %s603
          %606 = dma.vmem_to_hbm [thread:$0]  %s604, 64, %s601, %s586
        $region48: #{tpu_custom_call.1} parent=43 // pred_fallthru
          _
        // Predicated region
        $region49: #{tpu_custom_call.1} parent=43 // pred_check
          %p607 = pneg %p200
        $region50: #{tpu_custom_call.1} parent=43 // pred_check_branch
          %609 = sbr.rel (%p607) target = $region52
        $region51: #{tpu_custom_call.1} parent=43 // pred_region
          %s611 = ssub.s32 16, 16
          %612 = vsyncadd %s591, %s611
          %s613 = smul.addr %s25, 16
          %s614 = scalar_lea.hbm %s7, %s613
          %s616 = sshll.u32 %s593, 4
          %s617 = int_to_ptr.vmem [resolvable:$true] %s616
          %619 = dma.vmem_to_hbm [thread:$0]  %s617, 16, %s614, %s591
        $region52: #{tpu_custom_call.1} parent=43 // pred_fallthru
          _
      $region44: #{tpu_custom_call.1} parent=5 // pred_fallthru
        _
      %p620 = scmp.le.s32.totalorder 2, %s20
      // Predicated region
      $region53: #{tpu_custom_call.1} parent=5 // pred_check
        %p621 = pneg %p620
      $region54: #{tpu_custom_call.1} parent=5 // pred_check_branch
        %623 = sbr.rel (%p621) target = $region56
      $region55: #{tpu_custom_call.1} parent=5 // pred_region
        %s624 = ssub.s32 %s20, 2
        // Predicated region
        $region57: #{tpu_custom_call.1} parent=55 // pred_check
          %p625 = pneg %p180
        $region58: #{tpu_custom_call.1} parent=55 // pred_check_branch
          %627 = sbr.rel (%p625) target = $region60
        $region59: #{tpu_custom_call.1} parent=55 // pred_region
          %s628 = sand.u32 %s165, 1
          %s629 = scalar_lea.sflag [#allocation3], %s628
          %s630 = sand.u32 %s165, 1
          %s631 = smul.addr %s630, 4
          %s632 = scalar_lea.vmem [#allocation2], %s631
          %633 = dma.done %s629, 64
        $region60: #{tpu_custom_call.1} parent=55 // pred_fallthru
          _
        // Predicated region
        $region61: #{tpu_custom_call.1} parent=55 // pred_check
          %p634 = pneg %p206
        $region62: #{tpu_custom_call.1} parent=55 // pred_check_branch
          %636 = sbr.rel (%p634) target = $region64
        $region63: #{tpu_custom_call.1} parent=55 // pred_region
          %s637 = sand.u32 %s191, 1
          %s638 = scalar_lea.sflag [#allocation5], %s637
          %s639 = sand.u32 %s191, 1
          %s640 = scalar_lea.vmem [#allocation4], %s639
          %641 = dma.done %s638, 16
        $region64: #{tpu_custom_call.1} parent=55 // pred_fallthru
          _
      $region56: #{tpu_custom_call.1} parent=5 // pred_fallthru
        _
    $region6: #{tpu_custom_call.1} parent=1 // loop_footer
      %s24 = sadd.s32 1, %s20
    $region7: #{tpu_custom_call.1} parent=1 // loop_footer_branch
      %19 = sbr.rel target = $region3
    $region8: #{tpu_custom_call.1} parent=1 // loop_exit
      _
    %642 = vsyncpa [#allocation3], 1
    %s643 = scalar_lea.sflag [#allocation3], 1
    %644 = vsyncpa %s643, 1
    %645 = vsyncpa [#allocation5], 1
    %s646 = scalar_lea.sflag [#allocation5], 1
    %647 = vsyncpa %s646, 1

</llo_original>
